<compile_context>
chip_gen: v5e
topology: v5e:2x2
jax: 0.10.0
libtpu: 0.0.40
codegen_flags: <defaults>
</compile_context>

<pallas_src>
import functools
import math

import jax
import jax.numpy as jnp
from jax import lax
from jax.experimental import pallas as pl
from jax.experimental.pallas import tpu as pltpu

_LOG2E = math.log2(math.e)


def _sdpa_onepass_kernel(q_ref, k_ref, m_ref, v_ref, o_ref, *, scale, G, exp_dtype):
    """Single-pass SDPA (small S): whole kv dimension per step.
    Blocks: q (G, tq, D), k (G, S, D), v (G, S, Dv), mask (n_q, tq, S) resident,
    out (1, tq, G*Dv) lane-dense head-packed slab."""
    qi = pl.program_id(1)
    mask = m_ref[qi]                                    # (tq, S) f32, already * log2(e)

    parts = []
    for g in range(G):                                  # static unroll over packed heads
        q = (q_ref[g] * scale).astype(jnp.bfloat16)     # scale = log2(e)/sqrt(D)
        k = k_ref[g].astype(jnp.bfloat16)               # (S, D)
        v = v_ref[g].astype(jnp.bfloat16)               # (S, Dv)

        # s = Q @ K^T (scaled, base-2 domain) + mask; contract last dims (no transpose).
        s = lax.dot_general(q, k, (((1,), (1,)), ((), ())),
                            preferred_element_type=jnp.float32) + mask

        m_row = jnp.max(s, axis=-1, keepdims=True)
        m_safe = jnp.where(m_row == -jnp.inf, 0.0, m_row)      # fully-masked-row guard
        p = jnp.exp2((s - m_safe).astype(exp_dtype))           # base-2 softmax numerator
        l = jnp.sum(p, axis=-1, keepdims=True, dtype=jnp.float32)

        acc = lax.dot_general(p.astype(jnp.bfloat16), v, (((1,), (0,)), ((), ())),
                              preferred_element_type=jnp.float32)
        parts.append(acc * pl.reciprocal(l, approx=True))      # EUP slot

    # One lane-dense (tq, G*Dv) store.
    o_ref[0] = jnp.concatenate(parts, axis=-1).astype(o_ref.dtype)


def _sdpa_flash_kernel(q_ref, k_ref, m_ref, v_ref, o_ref,
                       q_sc, m_sc, l_sc, acc_sc, *,
                       scale, G, n_q, mask_resident, exp_dtype):
    """Flash / online-softmax SDPA. Blocks: q (G, tq, D), k (G, tk, D), v (G, tk, Dv),
    mask (n_kv*n_q, tq, tk) resident (or streamed (tq, tk)), out (1, tq, G*Dv)."""
    qi = pl.program_id(1)
    ki = pl.program_id(2)

    @pl.when(ki == 0)
    def _init():
        # Q block is constant across ki -> hoist scale + bf16 cast out of the kv loop.
        q_sc[...] = (q_ref[...] * scale).astype(jnp.bfloat16)
        m_sc[...] = jnp.full(m_sc.shape, -jnp.inf, dtype=jnp.float32)
        l_sc[...] = jnp.zeros(l_sc.shape, dtype=jnp.float32)
        acc_sc[...] = jnp.zeros(acc_sc.shape, dtype=jnp.float32)

    if mask_resident:
        mask = m_ref[ki * n_q + qi]                     # (tq, tk) tile of resident mask
    else:
        mask = m_ref[...]                               # streamed (tq, tk) tile

    for g in range(G):                                  # static unroll over packed heads
        k = k_ref[g].astype(jnp.bfloat16)               # (tk, D)
        v = v_ref[g].astype(jnp.bfloat16)               # (tk, Dv)
        s = lax.dot_general(q_sc[g], k, (((1,), (1,)), ((), ())),
                            preferred_element_type=jnp.float32) + mask

        m_prev = m_sc[g]                                                 # (tq, 1)
        m_new = jnp.maximum(m_prev, jnp.max(s, axis=-1, keepdims=True))
        m_safe = jnp.where(m_new == -jnp.inf, 0.0, m_new)                # all -inf guard
        alpha = jnp.exp2(m_prev - m_safe)                                # rescale factor
        p = jnp.exp2((s - m_safe).astype(exp_dtype))                     # (tq, tk)

        l_sc[g] = alpha * l_sc[g] + jnp.sum(p, axis=-1, keepdims=True,
                                            dtype=jnp.float32)
        acc_sc[g] = alpha * acc_sc[g] + lax.dot_general(
            p.astype(jnp.bfloat16), v, (((1,), (0,)), ((), ())),
            preferred_element_type=jnp.float32)
        m_sc[g] = m_new

    @pl.when(ki == pl.num_programs(2) - 1)
    def _finalize():
        parts = []
        for g in range(G):
            inv_l = pl.reciprocal(l_sc[g], approx=True)                  # EUP slot
            parts.append(acc_sc[g] * inv_l)
        o_ref[0] = jnp.concatenate(parts, axis=-1).astype(o_ref.dtype)


def _largest_divisor(n, limit, align):
    """Largest t <= limit with n % t == 0 and t % align == 0; falls back to n (full dim)."""
    for t in range(min(limit, n), align - 1, -1):
        if n % t == 0 and t % align == 0:
            return t
    return n


def sdpa_pallas(query, key, va, m4, *, q_tile=256, kv_tile=256, single_pass_max_s=256):
    """query, key: (B,H,S,D); va: (B,H,S,Dv); m4: additive mask broadcastable to (1,1,S,S)."""
    B, H, S, D = query.shape
    Dv = va.shape[-1]
    BH = B * H
    out_dtype = query.dtype

    # Head packing: G heads per grid step -> lane-dense G*Dv output slab, shared mask tile.
    G = math.gcd(128 // Dv, BH) if (Dv < 128 and 128 % Dv == 0) else 1
    BHG = BH // G

    # No wrapper dtype cast: bf16 Q/K/V are accepted as-is (kernel casts are no-ops then).
    q2 = query.reshape(BH, S, D)
    k2 = key.reshape(BH, S, D)
    v2 = va.reshape(BH, S, Dv)
    # Mask must be identical across batch & head; pre-scaled by log2(e) for the exp2 trick.
    m2 = jnp.broadcast_to(m4, (1, 1, S, S)).reshape(S, S).astype(jnp.float32) * _LOG2E
    scale = _LOG2E / math.sqrt(D)

    # Per-generation knobs.
    try:
        dk = jax.devices()[0].device_kind.lower()
    except Exception:
        dk = ""
    # bf16 exponentials only where the EUP has bf16 (v6e / v7x); f32 on v5e and older.
    exp_dtype = jnp.bfloat16 if ("v6" in dk or "v7" in dk) else jnp.float32
    # v7x: split the embarrassingly-parallel head-group axis across the 2 TensorCores.
    head_sem = (pltpu.CORE_PARALLEL
                if ("v7" in dk and BHG > 1 and BHG % 2 == 0) else pltpu.PARALLEL)

    tq = _largest_divisor(S, q_tile, 8)
    n_q = S // tq
    vmem_limit = 32 * 1024 * 1024     # safe scoped-VMEM limit on v5e / v6e / v7x

    if S <= single_pass_max_s:
        # Single-pass path: drop the kv grid axis and the online-softmax machinery.
        grid = (BHG, n_q)
        kernel = functools.partial(_sdpa_onepass_kernel,
                                   scale=scale, G=G, exp_dtype=exp_dtype)
        m_in = m2.reshape(n_q, tq, S)
        grid_spec = pltpu.PrefetchScalarGridSpec(
            num_scalar_prefetch=0,
            grid=grid,
            in_specs=[
                pl.BlockSpec((G, tq, D), lambda bh, qi: (bh, qi, 0)),    # Q
                pl.BlockSpec((G, S, D), lambda bh, qi: (bh, 0, 0)),      # K (full kv)
                pl.BlockSpec((n_q, tq, S), lambda bh, qi: (0, 0, 0)),    # mask, resident
                pl.BlockSpec((G, S, Dv), lambda bh, qi: (bh, 0, 0)),     # V (full kv)
            ],
            out_specs=pl.BlockSpec((1, tq, G * Dv), lambda bh, qi: (bh, qi, 0)),
        )
        dim_sem = (head_sem, pltpu.PARALLEL)
    else:
        tk = _largest_divisor(S, kv_tile, 128)
        n_kv = S // tk
        # Whole mask resident in VMEM when it fits (one DMA for the whole grid, not one
        # (tq,tk) tile per (head-group, q, kv) step). Pre-tiled so the kernel selects its
        # tile with a single leading-dim dynamic index (no in-kernel lane slicing).
        mask_resident = (2 * S * S * 4) <= (8 * 1024 * 1024)   # double-buffered budget
        if mask_resident:
            m_in = jnp.transpose(m2.reshape(n_q, tq, n_kv, tk),
                                 (2, 0, 1, 3)).reshape(n_kv * n_q, tq, tk)
            mask_spec = pl.BlockSpec((n_kv * n_q, tq, tk),
                                     lambda bh, qi, ki: (0, 0, 0))
        else:
            m_in = m2
            mask_spec = pl.BlockSpec((tq, tk), lambda bh, qi, ki: (qi, ki))
        grid = (BHG, n_q, n_kv)
        kernel = functools.partial(_sdpa_flash_kernel, scale=scale, G=G, n_q=n_q,
                                   mask_resident=mask_resident, exp_dtype=exp_dtype)
        grid_spec = pltpu.PrefetchScalarGridSpec(
            num_scalar_prefetch=0,
            grid=grid,
            in_specs=[
                pl.BlockSpec((G, tq, D), lambda bh, qi, ki: (bh, qi, 0)),    # Q
                pl.BlockSpec((G, tk, D), lambda bh, qi, ki: (bh, ki, 0)),    # K
                mask_spec,                                                   # mask
                pl.BlockSpec((G, tk, Dv), lambda bh, qi, ki: (bh, ki, 0)),   # V
            ],
            out_specs=pl.BlockSpec((1, tq, G * Dv), lambda bh, qi, ki: (bh, qi, 0)),
            scratch_shapes=[
                pltpu.VMEM((G, tq, D), jnp.bfloat16),   # Q*scale (hoisted out of kv loop)
                pltpu.VMEM((G, tq, 1), jnp.float32),    # running row max (base-2 domain)
                pltpu.VMEM((G, tq, 1), jnp.float32),    # running denominator
                pltpu.VMEM((G, tq, Dv), jnp.float32),   # output accumulators
            ],
        )
        dim_sem = (head_sem, pltpu.PARALLEL, pltpu.ARBITRARY)

    out_packed = pl.pallas_call(
        kernel,
        out_shape=jax.ShapeDtypeStruct((BHG, S, G * Dv), out_dtype),
        grid_spec=grid_spec,
        compiler_params=pltpu.CompilerParams(
            dimension_semantics=dim_sem,
            vmem_limit_bytes=vmem_limit,
        ),
    )(q2, k2, m_in, v2)

    # Un-pack the lane-dense head groups: (BHG, S, G*Dv) -> (B, H, S, Dv).
    out = out_packed.reshape(BHG, S, G, Dv)
    out = jnp.swapaxes(out, 1, 2).reshape(B, H, S, Dv)
    return out


def sdpa_reference(query, key, va, m4):
    d = query.shape[-1]
    qk = jnp.einsum("bhqd,bhkd->bhqk", query, key) / math.sqrt(d) + m4
    attn = jax.nn.softmax(qk, axis=-1)
    return jnp.einsum("bhqk,bhkd->bhqd", attn, va)


if __name__ == "__main__":
    # Case 1: small shapes consistent with the module's forward
    # (query/key: (B,H,S,D); Va: (B,H,S,Dv); m4 additive mask (1,1,S,S)) -> single-pass path.
    B, H, S, D, Dv = 2, 2, 64, 32, 32
    k0, k1, k2, k3 = jax.random.split(jax.random.PRNGKey(0), 4)
    query = jax.random.normal(k0, (B, H, S, D), dtype=jnp.float32)
    key = jax.random.normal(k1, (B, H, S, D), dtype=jnp.float32)
    va = jax.random.normal(k2, (B, H, S, Dv), dtype=jnp.float32)
    m4 = jax.random.normal(k3, (1, 1, S, S), dtype=jnp.float32)

    out = jax.block_until_ready(sdpa_pallas(query, key, va, m4))
    ref = sdpa_reference(query, key, va, m4)
    assert out.shape == (B, H, S, Dv)
    # bf16 MXU inputs, (bf16) exp2 and approx reciprocal -> bf16-grade tolerance.
    assert jnp.allclose(out, ref, atol=3e-2, rtol=3e-2), "single-pass path mismatch"

    # Case 2: larger S exercises the flash (online-softmax) path with a resident mask.
    B2, H2, S2 = 1, 4, 512
    kk = jax.random.split(jax.random.PRNGKey(1), 4)
    q_l = jax.random.normal(kk[0], (B2, H2, S2, D), dtype=jnp.float32)
    k_l = jax.random.normal(kk[1], (B2, H2, S2, D), dtype=jnp.float32)
    v_l = jax.random.normal(kk[2], (B2, H2, S2, Dv), dtype=jnp.float32)
    m_l = jax.random.normal(kk[3], (1, 1, S2, S2), dtype=jnp.float32)

    out2 = jax.block_until_ready(sdpa_pallas(q_l, k_l, v_l, m_l))
    ref2 = sdpa_reference(q_l, k_l, v_l, m_l)
    assert jnp.allclose(out2, ref2, atol=3e-2, rtol=3e-2), "flash path mismatch"

    print("KERNEL_OK")
</pallas_src>

<mosaic_0001>
module attributes {stable_mosaic.version = 11 : i64} {
  func.func @_sdpa_onepass_kernel(%arg0: i32, %arg1: i32, %arg2: memref<4x64x32xf32, #tpu.memory_space<vmem>>, %arg3: memref<4x64x32xf32, #tpu.memory_space<vmem>>, %arg4: memref<1x64x64xf32, #tpu.memory_space<vmem>>, %arg5: memref<4x64x32xf32, #tpu.memory_space<vmem>>, %arg6: memref<1x64x128xf32, #tpu.memory_space<vmem>>) attributes {dimension_semantics = [#tpu.dimension_semantics<parallel>, #tpu.dimension_semantics<parallel>], iteration_bounds = array<i64: 1, 1>, scalar_prefetch = 0 : i64, scratch_operands = 0 : i64, tpu.core_type = #tpu.core_type<tc>, window_params = [{transform_indices = @transform_0, window_bounds = array<i64: 4, 64, 32>}, {transform_indices = @transform_1, window_bounds = array<i64: 4, 64, 32>}, {pipeline_mode = #tpu.pipeline_mode<synchronous>, transform_indices = @transform_2, window_bounds = array<i64: 1, 64, 64>}, {transform_indices = @transform_3, window_bounds = array<i64: 4, 64, 32>}, {transform_indices = @transform_4, window_bounds = array<i64: 1, 64, 128>}]} {
    %0 = arith.index_cast %arg1 : i32 to index
    %c0 = arith.constant 0 : index
    %c0_0 = arith.constant 0 : index
    %1 = vector.load %arg4[%0, %c0, %c0_0] : memref<1x64x64xf32, #tpu.memory_space<vmem>>, vector<1x64x64xf32>
    %2 = vector.shape_cast %1 : vector<1x64x64xf32> to vector<64x64xf32>
    %c0_1 = arith.constant 0 : index
    %c0_2 = arith.constant 0 : index
    %c0_3 = arith.constant 0 : index
    %3 = vector.load %arg2[%c0_1, %c0_2, %c0_3] : memref<4x64x32xf32, #tpu.memory_space<vmem>>, vector<1x64x32xf32>
    %4 = vector.shape_cast %3 : vector<1x64x32xf32> to vector<64x32xf32>
    %cst = arith.constant 0.255034864 : f32
    %5 = vector.broadcast %cst : f32 to vector<64x32xf32>
    %6 = arith.mulf %4, %5 : vector<64x32xf32>
    %7 = arith.truncf %6 : vector<64x32xf32> to vector<64x32xbf16>
    %c0_4 = arith.constant 0 : index
    %c0_5 = arith.constant 0 : index
    %c0_6 = arith.constant 0 : index
    %8 = vector.load %arg3[%c0_4, %c0_5, %c0_6] : memref<4x64x32xf32, #tpu.memory_space<vmem>>, vector<1x64x32xf32>
    %9 = vector.shape_cast %8 : vector<1x64x32xf32> to vector<64x32xf32>
    %10 = arith.truncf %9 : vector<64x32xf32> to vector<64x32xbf16>
    %c0_7 = arith.constant 0 : index
    %c0_8 = arith.constant 0 : index
    %c0_9 = arith.constant 0 : index
    %11 = vector.load %arg5[%c0_7, %c0_8, %c0_9] : memref<4x64x32xf32, #tpu.memory_space<vmem>>, vector<1x64x32xf32>
    %12 = vector.shape_cast %11 : vector<1x64x32xf32> to vector<64x32xf32>
    %13 = arith.truncf %12 : vector<64x32xf32> to vector<64x32xbf16>
    %cst_10 = arith.constant dense<0.000000e+00> : vector<64x64xf32>
    %14 = tpu.matmul %7, %10, %cst_10 {dimension_numbers = #tpu.dot_dimension_numbers<[1], [1], [0], [0], [0, 0, 1, 0], [], []>} : vector<64x32xbf16>, vector<64x32xbf16>, vector<64x64xf32> -> vector<64x64xf32>
    %15 = arith.addf %14, %2 : vector<64x64xf32>
    %cst_11 = arith.constant dense<0xFF800000> : vector<64xf32>
    %16 = vector.multi_reduction <maximumf>, %15, %cst_11 [1] : vector<64x64xf32> to vector<64xf32>
    %17 = vector.shape_cast %16 : vector<64xf32> to vector<64x1xf32>
    %cst_12 = arith.constant 0xFF800000 : f32
    %18 = vector.broadcast %cst_12 : f32 to vector<64x1xf32>
    %19 = arith.cmpf oeq, %17, %18 : vector<64x1xf32>
    %cst_13 = arith.constant 0.000000e+00 : f32
    %20 = vector.broadcast %cst_13 : f32 to vector<64x1xf32>
    %21 = arith.select %19, %20, %17 : vector<64x1xi1>, vector<64x1xf32>
    %22 = vector.broadcast %21 : vector<64x1xf32> to vector<64x64xf32>
    %23 = arith.subf %15, %22 : vector<64x64xf32>
    %24 = math.exp2 %23 : vector<64x64xf32>
    %cst_14 = arith.constant dense<0.000000e+00> : vector<64xf32>
    %25 = vector.multi_reduction <add>, %24, %cst_14 [1] : vector<64x64xf32> to vector<64xf32>
    %26 = vector.shape_cast %25 : vector<64xf32> to vector<64x1xf32>
    %27 = arith.truncf %24 : vector<64x64xf32> to vector<64x64xbf16>
    %cst_15 = arith.constant dense<0.000000e+00> : vector<64x32xf32>
    %28 = tpu.matmul %27, %13, %cst_15 {dimension_numbers = #tpu.dot_dimension_numbers<[1], [0], [0], [1], [0, 0, 1, 1], [], []>} : vector<64x64xbf16>, vector<64x32xbf16>, vector<64x32xf32> -> vector<64x32xf32>
    %29 = tpu.reciprocal %26 {approx = true} : vector<64x1xf32> -> vector<64x1xf32>
    %30 = vector.broadcast %29 : vector<64x1xf32> to vector<64x32xf32>
    %31 = arith.mulf %28, %30 : vector<64x32xf32>
    %c1 = arith.constant 1 : index
    %c0_16 = arith.constant 0 : index
    %c0_17 = arith.constant 0 : index
    %32 = vector.load %arg2[%c1, %c0_16, %c0_17] : memref<4x64x32xf32, #tpu.memory_space<vmem>>, vector<1x64x32xf32>
    %33 = vector.shape_cast %32 : vector<1x64x32xf32> to vector<64x32xf32>
    %cst_18 = arith.constant 0.255034864 : f32
    %34 = vector.broadcast %cst_18 : f32 to vector<64x32xf32>
    %35 = arith.mulf %33, %34 : vector<64x32xf32>
    %36 = arith.truncf %35 : vector<64x32xf32> to vector<64x32xbf16>
    %c1_19 = arith.constant 1 : index
    %c0_20 = arith.constant 0 : index
    %c0_21 = arith.constant 0 : index
    %37 = vector.load %arg3[%c1_19, %c0_20, %c0_21] : memref<4x64x32xf32, #tpu.memory_space<vmem>>, vector<1x64x32xf32>
    %38 = vector.shape_cast %37 : vector<1x64x32xf32> to vector<64x32xf32>
    %39 = arith.truncf %38 : vector<64x32xf32> to vector<64x32xbf16>
    %c1_22 = arith.constant 1 : index
    %c0_23 = arith.constant 0 : index
    %c0_24 = arith.constant 0 : index
    %40 = vector.load %arg5[%c1_22, %c0_23, %c0_24] : memref<4x64x32xf32, #tpu.memory_space<vmem>>, vector<1x64x32xf32>
    %41 = vector.shape_cast %40 : vector<1x64x32xf32> to vector<64x32xf32>
    %42 = arith.truncf %41 : vector<64x32xf32> to vector<64x32xbf16>
    %cst_25 = arith.constant dense<0.000000e+00> : vector<64x64xf32>
    %43 = tpu.matmul %36, %39, %cst_25 {dimension_numbers = #tpu.dot_dimension_numbers<[1], [1], [0], [0], [0, 0, 1, 0], [], []>} : vector<64x32xbf16>, vector<64x32xbf16>, vector<64x64xf32> -> vector<64x64xf32>
    %44 = arith.addf %43, %2 : vector<64x64xf32>
    %cst_26 = arith.constant dense<0xFF800000> : vector<64xf32>
    %45 = vector.multi_reduction <maximumf>, %44, %cst_26 [1] : vector<64x64xf32> to vector<64xf32>
    %46 = vector.shape_cast %45 : vector<64xf32> to vector<64x1xf32>
    %cst_27 = arith.constant 0xFF800000 : f32
    %47 = vector.broadcast %cst_27 : f32 to vector<64x1xf32>
    %48 = arith.cmpf oeq, %46, %47 : vector<64x1xf32>
    %cst_28 = arith.constant 0.000000e+00 : f32
    %49 = vector.broadcast %cst_28 : f32 to vector<64x1xf32>
    %50 = arith.select %48, %49, %46 : vector<64x1xi1>, vector<64x1xf32>
    %51 = vector.broadcast %50 : vector<64x1xf32> to vector<64x64xf32>
    %52 = arith.subf %44, %51 : vector<64x64xf32>
    %53 = math.exp2 %52 : vector<64x64xf32>
    %cst_29 = arith.constant dense<0.000000e+00> : vector<64xf32>
    %54 = vector.multi_reduction <add>, %53, %cst_29 [1] : vector<64x64xf32> to vector<64xf32>
    %55 = vector.shape_cast %54 : vector<64xf32> to vector<64x1xf32>
    %56 = arith.truncf %53 : vector<64x64xf32> to vector<64x64xbf16>
    %cst_30 = arith.constant dense<0.000000e+00> : vector<64x32xf32>
    %57 = tpu.matmul %56, %42, %cst_30 {dimension_numbers = #tpu.dot_dimension_numbers<[1], [0], [0], [1], [0, 0, 1, 1], [], []>} : vector<64x64xbf16>, vector<64x32xbf16>, vector<64x32xf32> -> vector<64x32xf32>
    %58 = tpu.reciprocal %55 {approx = true} : vector<64x1xf32> -> vector<64x1xf32>
    %59 = vector.broadcast %58 : vector<64x1xf32> to vector<64x32xf32>
    %60 = arith.mulf %57, %59 : vector<64x32xf32>
    %c2 = arith.constant 2 : index
    %c0_31 = arith.constant 0 : index
    %c0_32 = arith.constant 0 : index
    %61 = vector.load %arg2[%c2, %c0_31, %c0_32] : memref<4x64x32xf32, #tpu.memory_space<vmem>>, vector<1x64x32xf32>
    %62 = vector.shape_cast %61 : vector<1x64x32xf32> to vector<64x32xf32>
    %cst_33 = arith.constant 0.255034864 : f32
    %63 = vector.broadcast %cst_33 : f32 to vector<64x32xf32>
    %64 = arith.mulf %62, %63 : vector<64x32xf32>
    %65 = arith.truncf %64 : vector<64x32xf32> to vector<64x32xbf16>
    %c2_34 = arith.constant 2 : index
    %c0_35 = arith.constant 0 : index
    %c0_36 = arith.constant 0 : index
    %66 = vector.load %arg3[%c2_34, %c0_35, %c0_36] : memref<4x64x32xf32, #tpu.memory_space<vmem>>, vector<1x64x32xf32>
    %67 = vector.shape_cast %66 : vector<1x64x32xf32> to vector<64x32xf32>
    %68 = arith.truncf %67 : vector<64x32xf32> to vector<64x32xbf16>
    %c2_37 = arith.constant 2 : index
    %c0_38 = arith.constant 0 : index
    %c0_39 = arith.constant 0 : index
    %69 = vector.load %arg5[%c2_37, %c0_38, %c0_39] : memref<4x64x32xf32, #tpu.memory_space<vmem>>, vector<1x64x32xf32>
    %70 = vector.shape_cast %69 : vector<1x64x32xf32> to vector<64x32xf32>
    %71 = arith.truncf %70 : vector<64x32xf32> to vector<64x32xbf16>
    %cst_40 = arith.constant dense<0.000000e+00> : vector<64x64xf32>
    %72 = tpu.matmul %65, %68, %cst_40 {dimension_numbers = #tpu.dot_dimension_numbers<[1], [1], [0], [0], [0, 0, 1, 0], [], []>} : vector<64x32xbf16>, vector<64x32xbf16>, vector<64x64xf32> -> vector<64x64xf32>
    %73 = arith.addf %72, %2 : vector<64x64xf32>
    %cst_41 = arith.constant dense<0xFF800000> : vector<64xf32>
    %74 = vector.multi_reduction <maximumf>, %73, %cst_41 [1] : vector<64x64xf32> to vector<64xf32>
    %75 = vector.shape_cast %74 : vector<64xf32> to vector<64x1xf32>
    %cst_42 = arith.constant 0xFF800000 : f32
    %76 = vector.broadcast %cst_42 : f32 to vector<64x1xf32>
    %77 = arith.cmpf oeq, %75, %76 : vector<64x1xf32>
    %cst_43 = arith.constant 0.000000e+00 : f32
    %78 = vector.broadcast %cst_43 : f32 to vector<64x1xf32>
    %79 = arith.select %77, %78, %75 : vector<64x1xi1>, vector<64x1xf32>
    %80 = vector.broadcast %79 : vector<64x1xf32> to vector<64x64xf32>
    %81 = arith.subf %73, %80 : vector<64x64xf32>
    %82 = math.exp2 %81 : vector<64x64xf32>
    %cst_44 = arith.constant dense<0.000000e+00> : vector<64xf32>
    %83 = vector.multi_reduction <add>, %82, %cst_44 [1] : vector<64x64xf32> to vector<64xf32>
    %84 = vector.shape_cast %83 : vector<64xf32> to vector<64x1xf32>
    %85 = arith.truncf %82 : vector<64x64xf32> to vector<64x64xbf16>
    %cst_45 = arith.constant dense<0.000000e+00> : vector<64x32xf32>
    %86 = tpu.matmul %85, %71, %cst_45 {dimension_numbers = #tpu.dot_dimension_numbers<[1], [0], [0], [1], [0, 0, 1, 1], [], []>} : vector<64x64xbf16>, vector<64x32xbf16>, vector<64x32xf32> -> vector<64x32xf32>
    %87 = tpu.reciprocal %84 {approx = true} : vector<64x1xf32> -> vector<64x1xf32>
    %88 = vector.broadcast %87 : vector<64x1xf32> to vector<64x32xf32>
    %89 = arith.mulf %86, %88 : vector<64x32xf32>
    %c3 = arith.constant 3 : index
    %c0_46 = arith.constant 0 : index
    %c0_47 = arith.constant 0 : index
    %90 = vector.load %arg2[%c3, %c0_46, %c0_47] : memref<4x64x32xf32, #tpu.memory_space<vmem>>, vector<1x64x32xf32>
    %91 = vector.shape_cast %90 : vector<1x64x32xf32> to vector<64x32xf32>
    %cst_48 = arith.constant 0.255034864 : f32
    %92 = vector.broadcast %cst_48 : f32 to vector<64x32xf32>
    %93 = arith.mulf %91, %92 : vector<64x32xf32>
    %94 = arith.truncf %93 : vector<64x32xf32> to vector<64x32xbf16>
    %c3_49 = arith.constant 3 : index
    %c0_50 = arith.constant 0 : index
    %c0_51 = arith.constant 0 : index
    %95 = vector.load %arg3[%c3_49, %c0_50, %c0_51] : memref<4x64x32xf32, #tpu.memory_space<vmem>>, vector<1x64x32xf32>
    %96 = vector.shape_cast %95 : vector<1x64x32xf32> to vector<64x32xf32>
    %97 = arith.truncf %96 : vector<64x32xf32> to vector<64x32xbf16>
    %c3_52 = arith.constant 3 : index
    %c0_53 = arith.constant 0 : index
    %c0_54 = arith.constant 0 : index
    %98 = vector.load %arg5[%c3_52, %c0_53, %c0_54] : memref<4x64x32xf32, #tpu.memory_space<vmem>>, vector<1x64x32xf32>
    %99 = vector.shape_cast %98 : vector<1x64x32xf32> to vector<64x32xf32>
    %100 = arith.truncf %99 : vector<64x32xf32> to vector<64x32xbf16>
    %cst_55 = arith.constant dense<0.000000e+00> : vector<64x64xf32>
    %101 = tpu.matmul %94, %97, %cst_55 {dimension_numbers = #tpu.dot_dimension_numbers<[1], [1], [0], [0], [0, 0, 1, 0], [], []>} : vector<64x32xbf16>, vector<64x32xbf16>, vector<64x64xf32> -> vector<64x64xf32>
    %102 = arith.addf %101, %2 : vector<64x64xf32>
    %cst_56 = arith.constant dense<0xFF800000> : vector<64xf32>
    %103 = vector.multi_reduction <maximumf>, %102, %cst_56 [1] : vector<64x64xf32> to vector<64xf32>
    %104 = vector.shape_cast %103 : vector<64xf32> to vector<64x1xf32>
    %cst_57 = arith.constant 0xFF800000 : f32
    %105 = vector.broadcast %cst_57 : f32 to vector<64x1xf32>
    %106 = arith.cmpf oeq, %104, %105 : vector<64x1xf32>
    %cst_58 = arith.constant 0.000000e+00 : f32
    %107 = vector.broadcast %cst_58 : f32 to vector<64x1xf32>
    %108 = arith.select %106, %107, %104 : vector<64x1xi1>, vector<64x1xf32>
    %109 = vector.broadcast %108 : vector<64x1xf32> to vector<64x64xf32>
    %110 = arith.subf %102, %109 : vector<64x64xf32>
    %111 = math.exp2 %110 : vector<64x64xf32>
    %cst_59 = arith.constant dense<0.000000e+00> : vector<64xf32>
    %112 = vector.multi_reduction <add>, %111, %cst_59 [1] : vector<64x64xf32> to vector<64xf32>
    %113 = vector.shape_cast %112 : vector<64xf32> to vector<64x1xf32>
    %114 = arith.truncf %111 : vector<64x64xf32> to vector<64x64xbf16>
    %cst_60 = arith.constant dense<0.000000e+00> : vector<64x32xf32>
    %115 = tpu.matmul %114, %100, %cst_60 {dimension_numbers = #tpu.dot_dimension_numbers<[1], [0], [0], [1], [0, 0, 1, 1], [], []>} : vector<64x64xbf16>, vector<64x32xbf16>, vector<64x32xf32> -> vector<64x32xf32>
    %116 = tpu.reciprocal %113 {approx = true} : vector<64x1xf32> -> vector<64x1xf32>
    %117 = vector.broadcast %116 : vector<64x1xf32> to vector<64x32xf32>
    %118 = arith.mulf %115, %117 : vector<64x32xf32>
    %119 = tpu.concatenate %31, %60, %89, %118 in 1 : vector<64x32xf32>, vector<64x32xf32>, vector<64x32xf32>, vector<64x32xf32> -> vector<64x128xf32>
    %c0_61 = arith.constant 0 : index
    %c0_62 = arith.constant 0 : index
    %c0_63 = arith.constant 0 : index
    %120 = vector.load %arg6[%c0_61, %c0_62, %c0_63] : memref<1x64x128xf32, #tpu.memory_space<vmem>>, vector<1x64x128xf32>
    %121 = vector.shape_cast %120 : vector<1x64x128xf32> to vector<64x128xf32>
    %122 = vector.shape_cast %119 : vector<64x128xf32> to vector<1x64x128xf32>
    tpu.vector_store %arg6[%c0_61, %c0_62, %c0_63], %122 {strides = array<i32>} : memref<1x64x128xf32, #tpu.memory_space<vmem>>, vector<1x64x128xf32>,
    return
  }
  func.func @transform_0(%arg0: i32, %arg1: i32) -> (i32, i32, i32) {
    %c0_i32 = arith.constant 0 : i32
    %c0_i32_0 = arith.constant 0 : i32
    return %arg0, %arg1, %c0_i32 : i32, i32, i32
  }
  func.func @transform_1(%arg0: i32, %arg1: i32) -> (i32, i32, i32) {
    %c0_i32 = arith.constant 0 : i32
    %c0_i32_0 = arith.constant 0 : i32
    %c0_i32_1 = arith.constant 0 : i32
    return %arg0, %c0_i32, %c0_i32_0 : i32, i32, i32
  }
  func.func @transform_2(%arg0: i32, %arg1: i32) -> (i32, i32, i32) {
    %c0_i32 = arith.constant 0 : i32
    %c0_i32_0 = arith.constant 0 : i32
    %c0_i32_1 = arith.constant 0 : i32
    %c0_i32_2 = arith.constant 0 : i32
    return %c0_i32, %c0_i32_0, %c0_i32_1 : i32, i32, i32
  }
  func.func @transform_3(%arg0: i32, %arg1: i32) -> (i32, i32, i32) {
    %c0_i32 = arith.constant 0 : i32
    %c0_i32_0 = arith.constant 0 : i32
    %c0_i32_1 = arith.constant 0 : i32
    return %arg0, %c0_i32, %c0_i32_0 : i32, i32, i32
  }
  func.func @transform_4(%arg0: i32, %arg1: i32) -> (i32, i32, i32) {
    %c0_i32 = arith.constant 0 : i32
    %c0_i32_0 = arith.constant 0 : i32
    return %arg0, %arg1, %c0_i32 : i32, i32, i32
  }
}

</mosaic_0001>

<llo_original>
// kernel: tpu_custom_call.1
$region0: #{tpu_custom_call.1}
  #allocation0 [shape = 'u32[]', space=smem, size = 0x4, offset = 0x4, fixed_abs, tag = 'smem constant byte address 0x4 - core index']
  #allocation1 [shape = 'u32[72,128]{1,0:T(1,128)}', space=vmem, size = 0x9000, scoped, tag = 'internal scratch']
  %s0 = inlined_call_operand.vmem [shape: f32[4,64,32], index: 0, kind: input, shape index: {}]
  %s1 = inlined_call_operand.vmem [shape: f32[4,64,32], index: 1, kind: input, shape index: {}]
  %s2 = inlined_call_operand.vmem [shape: f32[1,64,64], index: 2, kind: input, shape index: {}]
  %s3 = inlined_call_operand.vmem [shape: f32[4,64,32], index: 3, kind: input, shape index: {}]
  %s4 = inlined_call_operand.hbm [shape: f32[1,64,128], index: 4, kind: output, shape index: {}]
  %s5 = sld [smem:[#allocation0]]
  $region26: #{tpu_custom_call.1} parent=0
    _
  %s7 = ssub.s32 1, %s5
  %s8 = scalar_select 0, %s7, %s5
  $region1: #{tpu_custom_call.1} parent=0
    #allocation2 [shape = 'u8[32768]{0}', space=vmem, size = 0x8000, scoped, tag = 'output window, operand 0, single buffered']
    #allocation3 [shape = 's32[1]{0}', space=sflag, size = 0x4, scoped, tag = 'scoped memory for tpu_custom_call.1']
    %9 = vsyncpa [#allocation3], 0
    // Predicated region
    $region2: #{tpu_custom_call.1} parent=1 // pred_check
      _
    $region3: #{tpu_custom_call.1} parent=1 // pred_check_branch
      %11 = sbr.rel (0) target = $region5
    $region4: #{tpu_custom_call.1} parent=1 // pred_region
      _
    $region5: #{tpu_custom_call.1} parent=1 // pred_fallthru
      _
    // Predicated region
    $region6: #{tpu_custom_call.1} parent=1 // pred_check
      _
    $region7: #{tpu_custom_call.1} parent=1 // pred_check_branch
      %13 = sbr.rel (0) target = $region9
    $region8: #{tpu_custom_call.1} parent=1 // pred_region
      _
    $region9: #{tpu_custom_call.1} parent=1 // pred_fallthru
      _
    // Predicated region
    $region10: #{tpu_custom_call.1} parent=1 // pred_check
      _
    $region11: #{tpu_custom_call.1} parent=1 // pred_check_branch
      %15 = sbr.rel (0) target = $region13
    $region12: #{tpu_custom_call.1} parent=1 // pred_region
      _
    $region13: #{tpu_custom_call.1} parent=1 // pred_fallthru
      _
    // Predicated region
    $region14: #{tpu_custom_call.1} parent=1 // pred_check
      _
    $region15: #{tpu_custom_call.1} parent=1 // pred_check_branch
      %17 = sbr.rel (0) target = $region17
    $region16: #{tpu_custom_call.1} parent=1 // pred_region
      _
    $region17: #{tpu_custom_call.1} parent=1 // pred_fallthru
      _
    %s19 = smul.u32 0, 64
    %s20 = scalar_lea.vmem %s2, %s19
    %v21 = vld [vmem:[%s20] sm:$0xff]
    %v22 = vld [vmem:[%s20 + $0x8] sm:$0xff]
    %v23 = vld [vmem:[%s20 + $0x10] sm:$0xff]
    %v24 = vld [vmem:[%s20 + $0x18] sm:$0xff]
    %v25 = vld [vmem:[%s20 + $0x20] sm:$0xff]
    %v26 = vld [vmem:[%s20 + $0x28] sm:$0xff]
    %v27 = vld [vmem:[%s20 + $0x30] sm:$0xff]
    %v28 = vld [vmem:[%s20 + $0x38] sm:$0xff]
    %v29 = vld [vmem:[%s0] sm:$0xff]
    %v30 = vld [vmem:[%s0 + $0x8] sm:$0xff]
    %v31 = vld [vmem:[%s0 + $0x10] sm:$0xff]
    %v32 = vld [vmem:[%s0 + $0x18] sm:$0xff]
    %v33 = vld [vmem:[%s0 + $0x20] sm:$0xff]
    %v34 = vld [vmem:[%s0 + $0x28] sm:$0xff]
    %v35 = vld [vmem:[%s0 + $0x30] sm:$0xff]
    %v36 = vld [vmem:[%s0 + $0x38] sm:$0xff]
    %v37 = vmul.f32 %v29, 0.25503486
    %v38 = vmul.f32 %v30, 0.25503486
    %v39 = vmul.f32 %v31, 0.25503486
    %v40 = vmul.f32 %v32, 0.25503486
    %v41 = vmul.f32 %v33, 0.25503486
    %v42 = vmul.f32 %v34, 0.25503486
    %v43 = vmul.f32 %v35, 0.25503486
    %v44 = vmul.f32 %v36, 0.25503486
    %v45 = vpack.c.bf16 %v38, %v37
    %v46 = vpack.c.bf16 %v40, %v39
    %v47 = vpack.c.bf16 %v42, %v41
    %v48 = vpack.c.bf16 %v44, %v43
    %v49 = vld [vmem:[%s1] sm:$0xff]
    %v50 = vld [vmem:[%s1 + $0x8] sm:$0xff]
    %v51 = vld [vmem:[%s1 + $0x10] sm:$0xff]
    %v52 = vld [vmem:[%s1 + $0x18] sm:$0xff]
    %v53 = vld [vmem:[%s1 + $0x20] sm:$0xff]
    %v54 = vld [vmem:[%s1 + $0x28] sm:$0xff]
    %v55 = vld [vmem:[%s1 + $0x30] sm:$0xff]
    %v56 = vld [vmem:[%s1 + $0x38] sm:$0xff]
    %v57 = vpack.c.bf16 %v50, %v49
    %v58 = vpack.c.bf16 %v52, %v51
    %v59 = vpack.c.bf16 %v54, %v53
    %v60 = vpack.c.bf16 %v56, %v55
    %v61 = vld [vmem:[%s3] sm:$0xff]
    %v62 = vld [vmem:[%s3 + $0x8] sm:$0xff]
    %v63 = vld [vmem:[%s3 + $0x10] sm:$0xff]
    %v64 = vld [vmem:[%s3 + $0x18] sm:$0xff]
    %v65 = vld [vmem:[%s3 + $0x20] sm:$0xff]
    %v66 = vld [vmem:[%s3 + $0x28] sm:$0xff]
    %v67 = vld [vmem:[%s3 + $0x30] sm:$0xff]
    %v68 = vld [vmem:[%s3 + $0x38] sm:$0xff]
    %v69 = vpack.c.bf16 %v62, %v61
    %v70 = vpack.c.bf16 %v64, %v63
    %v71 = vpack.c.bf16 %v66, %v65
    %v72 = vpack.c.bf16 %v68, %v67
    %vm73 = vcmask 261120
    %v75 = vsel %vm73, %v45, 0
    %v78 = vsel %vm73, %v46, 0
    %v81 = vsel %vm73, %v47, 0
    %v84 = vsel %vm73, %v48, 0
    %v87 = vsel %vm73, %v57, 0
    %v90 = vsel %vm73, %v58, 0
    %v93 = vsel %vm73, %v59, 0
    %v96 = vsel %vm73, %v60, 0
    %98 = vmatpush.bf16.xpose.msra.mxu0 0
    %99 = vmatpush.bf16.xpose.msra.mxu0 0
    %100 = vmatpush.bf16.xpose.msra.mxu0 0
    %101 = vmatpush.bf16.xpose.msra.mxu0 0
    %102 = vmatpush.bf16.xpose.msra.mxu0 %v96
    %103 = vmatpush.bf16.xpose.msra.mxu0 %v93
    %104 = vmatpush.bf16.xpose.msra.mxu0 %v90
    %105 = vmatpush.bf16.xpose.msra.mxu0 %v87
    %106 = vmatmul.bf16.gmra.mxu0 %v75
    %v107 = vpop.f32.mrf.mxu0
    %v108 = vadd.f32 %v21, %v107
    %v109 = vpop.f32.mrf.mxu0
    %v110 = vadd.f32 %v22, %v109
    %111 = vmatmul.bf16.gmra.mxu0 %v78
    %v112 = vpop.f32.mrf.mxu0
    %v113 = vadd.f32 %v23, %v112
    %v114 = vpop.f32.mrf.mxu0
    %v115 = vadd.f32 %v24, %v114
    %116 = vmatmul.bf16.gmra.mxu0 %v81
    %v117 = vpop.f32.mrf.mxu0
    %v118 = vadd.f32 %v25, %v117
    %v119 = vpop.f32.mrf.mxu0
    %v120 = vadd.f32 %v26, %v119
    %121 = vmatmul.bf16.gmra.mxu0 %v84
    %v122 = vpop.f32.mrf.mxu0
    %v123 = vadd.f32 %v27, %v122
    %v124 = vpop.f32.mrf.mxu0
    %v125 = vadd.f32 %v28, %v124
    %126 = vdwg.mxu0
    %vm127 = vcmask 523264
    %v128 = vsel %vm127, %v108, -inf
    %129 = vmax.xlane.f32.xlu0 %v128
    %v130 = vpop.xlane.xlu0 %129
    %v131 = vsel %vm127, %v110, -inf
    %132 = vmax.xlane.f32.xlu0 %v131
    %v133 = vpop.xlane.xlu0 %132
    %v134 = vsel %vm127, %v113, -inf
    %135 = vmax.xlane.f32.xlu0 %v134
    %v136 = vpop.xlane.xlu0 %135
    %v137 = vsel %vm127, %v115, -inf
    %138 = vmax.xlane.f32.xlu0 %v137
    %v139 = vpop.xlane.xlu0 %138
    %v140 = vsel %vm127, %v118, -inf
    %141 = vmax.xlane.f32.xlu0 %v140
    %v142 = vpop.xlane.xlu0 %141
    %v143 = vsel %vm127, %v120, -inf
    %144 = vmax.xlane.f32.xlu0 %v143
    %v145 = vpop.xlane.xlu0 %144
    %v146 = vsel %vm127, %v123, -inf
    %147 = vmax.xlane.f32.xlu0 %v146
    %v148 = vpop.xlane.xlu0 %147
    %v149 = vsel %vm127, %v125, -inf
    %150 = vmax.xlane.f32.xlu0 %v149
    %v151 = vpop.xlane.xlu0 %150
    %vm152 = vcmp.eq.f32.partialorder %v130, -inf
    %vm153 = vcmp.eq.f32.partialorder %v133, -inf
    %vm154 = vcmp.eq.f32.partialorder %v136, -inf
    %vm155 = vcmp.eq.f32.partialorder %v139, -inf
    %vm156 = vcmp.eq.f32.partialorder %v142, -inf
    %vm157 = vcmp.eq.f32.partialorder %v145, -inf
    %vm158 = vcmp.eq.f32.partialorder %v148, -inf
    %vm159 = vcmp.eq.f32.partialorder %v151, -inf
    %v160 = vsel %vm152, 0.0, %v130
    %v161 = vsel %vm153, 0.0, %v133
    %v162 = vsel %vm154, 0.0, %v136
    %v163 = vsel %vm155, 0.0, %v139
    %v164 = vsel %vm156, 0.0, %v142
    %v165 = vsel %vm157, 0.0, %v145
    %v166 = vsel %vm158, 0.0, %v148
    %v167 = vsel %vm159, 0.0, %v151
    %v168 = vsub.f32 %v108, %v160
    %v169 = vsub.f32 %v110, %v161
    %v170 = vsub.f32 %v113, %v162
    %v171 = vsub.f32 %v115, %v163
    %v172 = vsub.f32 %v118, %v164
    %v173 = vsub.f32 %v120, %v165
    %v174 = vsub.f32 %v123, %v166
    %v175 = vsub.f32 %v125, %v167
    %v176 = vpow.pop %v168
    %v177 = vpow.pop %v169
    %v178 = vpow.pop %v170
    %v179 = vpow.pop %v171
    %v180 = vpow.pop %v172
    %v181 = vpow.pop %v173
    %v182 = vpow.pop %v174
    %v183 = vpow.pop %v175
    %v184 = vsel %vm127, %v176, 0.0
    %185 = vadd.xlane.f32.xlu0 %v184
    %v186 = vpop.xlane.xlu0 %185
    %v187 = vsel %vm127, %v177, 0.0
    %188 = vadd.xlane.f32.xlu0 %v187
    %v189 = vpop.xlane.xlu0 %188
    %v190 = vsel %vm127, %v178, 0.0
    %191 = vadd.xlane.f32.xlu0 %v190
    %v192 = vpop.xlane.xlu0 %191
    %v193 = vsel %vm127, %v179, 0.0
    %194 = vadd.xlane.f32.xlu0 %v193
    %v195 = vpop.xlane.xlu0 %194
    %v196 = vsel %vm127, %v180, 0.0
    %197 = vadd.xlane.f32.xlu0 %v196
    %v198 = vpop.xlane.xlu0 %197
    %v199 = vsel %vm127, %v181, 0.0
    %200 = vadd.xlane.f32.xlu0 %v199
    %v201 = vpop.xlane.xlu0 %200
    %v202 = vsel %vm127, %v182, 0.0
    %203 = vadd.xlane.f32.xlu0 %v202
    %v204 = vpop.xlane.xlu0 %203
    %v205 = vsel %vm127, %v183, 0.0
    %206 = vadd.xlane.f32.xlu0 %v205
    %v207 = vpop.xlane.xlu0 %206
    %v208 = vpack.c.bf16 %v177, %v176
    %v209 = vpack.c.bf16 %v179, %v178
    %v210 = vpack.c.bf16 %v181, %v180
    %v211 = vpack.c.bf16 %v183, %v182
    %v213 = vsel %vm127, %v208, 0
    %v216 = vsel %vm127, %v209, 0
    %v219 = vsel %vm127, %v210, 0
    %v222 = vsel %vm127, %v211, 0
    %224 = vmatpush.bf16.msra.mxu0 0
    %225 = vmatpush.bf16.msra.mxu0 0
    %226 = vmatpush.bf16.msra.mxu0 0
    %227 = vmatpush.bf16.msra.mxu0 0
    %228 = vmatpush.bf16.msra.mxu0 %v72
    %229 = vmatpush.bf16.msra.mxu0 %v71
    %230 = vmatpush.bf16.msra.mxu0 %v70
    %231 = vmatpush.bf16.msra.mxu0 %v69
    %232 = vmatmul.bf16.gmra.mxu0 %v213
    %v233 = vpop.f32.mrf.mxu0
    %v234 = vadd.f32 0.0, %v233
    %v235 = vpop.f32.mrf.mxu0
    %v236 = vadd.f32 0.0, %v235
    %237 = vmatmul.bf16.gmra.mxu0 %v216
    %v238 = vpop.f32.mrf.mxu0
    %v239 = vadd.f32 0.0, %v238
    %v240 = vpop.f32.mrf.mxu0
    %v241 = vadd.f32 0.0, %v240
    %242 = vmatmul.bf16.gmra.mxu0 %v219
    %v243 = vpop.f32.mrf.mxu0
    %v244 = vadd.f32 0.0, %v243
    %v245 = vpop.f32.mrf.mxu0
    %v246 = vadd.f32 0.0, %v245
    %247 = vmatmul.bf16.gmra.mxu0 %v222
    %v248 = vpop.f32.mrf.mxu0
    %v249 = vadd.f32 0.0, %v248
    %v250 = vpop.f32.mrf.mxu0
    %v251 = vadd.f32 0.0, %v250
    %252 = vdwg.mxu0
    %v253 = vrcp.pop %v186
    %v254 = vrcp.pop %v189
    %v255 = vrcp.pop %v192
    %v256 = vrcp.pop %v195
    %v257 = vrcp.pop %v198
    %v258 = vrcp.pop %v201
    %v259 = vrcp.pop %v204
    %v260 = vrcp.pop %v207
    %v261 = vmul.f32 %v234, %v253
    %v262 = vmul.f32 %v236, %v254
    %v263 = vmul.f32 %v239, %v255
    %v264 = vmul.f32 %v241, %v256
    %v265 = vmul.f32 %v244, %v257
    %v266 = vmul.f32 %v246, %v258
    %v267 = vmul.f32 %v249, %v259
    %v268 = vmul.f32 %v251, %v260
    %s269 = scalar_lea.vmem %s0, 64
    %v270 = vld [vmem:[%s269] sm:$0xff]
    %v271 = vld [vmem:[%s269 + $0x8] sm:$0xff]
    %v272 = vld [vmem:[%s269 + $0x10] sm:$0xff]
    %v273 = vld [vmem:[%s269 + $0x18] sm:$0xff]
    %v274 = vld [vmem:[%s269 + $0x20] sm:$0xff]
    %v275 = vld [vmem:[%s269 + $0x28] sm:$0xff]
    %v276 = vld [vmem:[%s269 + $0x30] sm:$0xff]
    %v277 = vld [vmem:[%s269 + $0x38] sm:$0xff]
    %v278 = vmul.f32 %v270, 0.25503486
    %v279 = vmul.f32 %v271, 0.25503486
    %v280 = vmul.f32 %v272, 0.25503486
    %v281 = vmul.f32 %v273, 0.25503486
    %v282 = vmul.f32 %v274, 0.25503486
    %v283 = vmul.f32 %v275, 0.25503486
    %v284 = vmul.f32 %v276, 0.25503486
    %v285 = vmul.f32 %v277, 0.25503486
    %v286 = vpack.c.bf16 %v279, %v278
    %v287 = vpack.c.bf16 %v281, %v280
    %v288 = vpack.c.bf16 %v283, %v282
    %v289 = vpack.c.bf16 %v285, %v284
    %s290 = scalar_lea.vmem %s1, 64
    %v291 = vld [vmem:[%s290] sm:$0xff]
    %v292 = vld [vmem:[%s290 + $0x8] sm:$0xff]
    %v293 = vld [vmem:[%s290 + $0x10] sm:$0xff]
    %v294 = vld [vmem:[%s290 + $0x18] sm:$0xff]
    %v295 = vld [vmem:[%s290 + $0x20] sm:$0xff]
    %v296 = vld [vmem:[%s290 + $0x28] sm:$0xff]
    %v297 = vld [vmem:[%s290 + $0x30] sm:$0xff]
    %v298 = vld [vmem:[%s290 + $0x38] sm:$0xff]
    %v299 = vpack.c.bf16 %v292, %v291
    %v300 = vpack.c.bf16 %v294, %v293
    %v301 = vpack.c.bf16 %v296, %v295
    %v302 = vpack.c.bf16 %v298, %v297
    %s303 = scalar_lea.vmem %s3, 64
    %v304 = vld [vmem:[%s303] sm:$0xff]
    %v305 = vld [vmem:[%s303 + $0x8] sm:$0xff]
    %v306 = vld [vmem:[%s303 + $0x10] sm:$0xff]
    %v307 = vld [vmem:[%s303 + $0x18] sm:$0xff]
    %v308 = vld [vmem:[%s303 + $0x20] sm:$0xff]
    %v309 = vld [vmem:[%s303 + $0x28] sm:$0xff]
    %v310 = vld [vmem:[%s303 + $0x30] sm:$0xff]
    %v311 = vld [vmem:[%s303 + $0x38] sm:$0xff]
    %v312 = vpack.c.bf16 %v305, %v304
    %v313 = vpack.c.bf16 %v307, %v306
    %v314 = vpack.c.bf16 %v309, %v308
    %v315 = vpack.c.bf16 %v311, %v310
    %v317 = vsel %vm73, %v286, 0
    %v320 = vsel %vm73, %v287, 0
    %v323 = vsel %vm73, %v288, 0
    %v326 = vsel %vm73, %v289, 0
    %v329 = vsel %vm73, %v299, 0
    %v332 = vsel %vm73, %v300, 0
    %v335 = vsel %vm73, %v301, 0
    %v338 = vsel %vm73, %v302, 0
    %340 = vmatpush.bf16.xpose.msra.mxu0 0
    %341 = vmatpush.bf16.xpose.msra.mxu0 0
    %342 = vmatpush.bf16.xpose.msra.mxu0 0
    %343 = vmatpush.bf16.xpose.msra.mxu0 0
    %344 = vmatpush.bf16.xpose.msra.mxu0 %v338
    %345 = vmatpush.bf16.xpose.msra.mxu0 %v335
    %346 = vmatpush.bf16.xpose.msra.mxu0 %v332
    %347 = vmatpush.bf16.xpose.msra.mxu0 %v329
    %348 = vmatmul.bf16.gmra.mxu0 %v317
    %v349 = vpop.f32.mrf.mxu0
    %v350 = vadd.f32 %v21, %v349
    %v351 = vpop.f32.mrf.mxu0
    %v352 = vadd.f32 %v22, %v351
    %353 = vmatmul.bf16.gmra.mxu0 %v320
    %v354 = vpop.f32.mrf.mxu0
    %v355 = vadd.f32 %v23, %v354
    %v356 = vpop.f32.mrf.mxu0
    %v357 = vadd.f32 %v24, %v356
    %358 = vmatmul.bf16.gmra.mxu0 %v323
    %v359 = vpop.f32.mrf.mxu0
    %v360 = vadd.f32 %v25, %v359
    %v361 = vpop.f32.mrf.mxu0
    %v362 = vadd.f32 %v26, %v361
    %363 = vmatmul.bf16.gmra.mxu0 %v326
    %v364 = vpop.f32.mrf.mxu0
    %v365 = vadd.f32 %v27, %v364
    %v366 = vpop.f32.mrf.mxu0
    %v367 = vadd.f32 %v28, %v366
    %368 = vdwg.mxu0
    %v369 = vsel %vm127, %v350, -inf
    %370 = vmax.xlane.f32.xlu0 %v369
    %v371 = vpop.xlane.xlu0 %370
    %v372 = vsel %vm127, %v352, -inf
    %373 = vmax.xlane.f32.xlu0 %v372
    %v374 = vpop.xlane.xlu0 %373
    %v375 = vsel %vm127, %v355, -inf
    %376 = vmax.xlane.f32.xlu0 %v375
    %v377 = vpop.xlane.xlu0 %376
    %v378 = vsel %vm127, %v357, -inf
    %379 = vmax.xlane.f32.xlu0 %v378
    %v380 = vpop.xlane.xlu0 %379
    %v381 = vsel %vm127, %v360, -inf
    %382 = vmax.xlane.f32.xlu0 %v381
    %v383 = vpop.xlane.xlu0 %382
    %v384 = vsel %vm127, %v362, -inf
    %385 = vmax.xlane.f32.xlu0 %v384
    %v386 = vpop.xlane.xlu0 %385
    %v387 = vsel %vm127, %v365, -inf
    %388 = vmax.xlane.f32.xlu0 %v387
    %v389 = vpop.xlane.xlu0 %388
    %v390 = vsel %vm127, %v367, -inf
    %391 = vmax.xlane.f32.xlu0 %v390
    %v392 = vpop.xlane.xlu0 %391
    %vm393 = vcmp.eq.f32.partialorder %v371, -inf
    %vm394 = vcmp.eq.f32.partialorder %v374, -inf
    %vm395 = vcmp.eq.f32.partialorder %v377, -inf
    %vm396 = vcmp.eq.f32.partialorder %v380, -inf
    %vm397 = vcmp.eq.f32.partialorder %v383, -inf
    %vm398 = vcmp.eq.f32.partialorder %v386, -inf
    %vm399 = vcmp.eq.f32.partialorder %v389, -inf
    %vm400 = vcmp.eq.f32.partialorder %v392, -inf
    %v401 = vsel %vm393, 0.0, %v371
    %v402 = vsel %vm394, 0.0, %v374
    %v403 = vsel %vm395, 0.0, %v377
    %v404 = vsel %vm396, 0.0, %v380
    %v405 = vsel %vm397, 0.0, %v383
    %v406 = vsel %vm398, 0.0, %v386
    %v407 = vsel %vm399, 0.0, %v389
    %v408 = vsel %vm400, 0.0, %v392
    %v409 = vsub.f32 %v350, %v401
    %v410 = vsub.f32 %v352, %v402
    %v411 = vsub.f32 %v355, %v403
    %v412 = vsub.f32 %v357, %v404
    %v413 = vsub.f32 %v360, %v405
    %v414 = vsub.f32 %v362, %v406
    %v415 = vsub.f32 %v365, %v407
    %v416 = vsub.f32 %v367, %v408
    %v417 = vpow.pop %v409
    %v418 = vpow.pop %v410
    %v419 = vpow.pop %v411
    %v420 = vpow.pop %v412
    %v421 = vpow.pop %v413
    %v422 = vpow.pop %v414
    %v423 = vpow.pop %v415
    %v424 = vpow.pop %v416
    %v425 = vsel %vm127, %v417, 0.0
    %426 = vadd.xlane.f32.xlu0 %v425
    %v427 = vpop.xlane.xlu0 %426
    %v428 = vsel %vm127, %v418, 0.0
    %429 = vadd.xlane.f32.xlu0 %v428
    %v430 = vpop.xlane.xlu0 %429
    %v431 = vsel %vm127, %v419, 0.0
    %432 = vadd.xlane.f32.xlu0 %v431
    %v433 = vpop.xlane.xlu0 %432
    %v434 = vsel %vm127, %v420, 0.0
    %435 = vadd.xlane.f32.xlu0 %v434
    %v436 = vpop.xlane.xlu0 %435
    %v437 = vsel %vm127, %v421, 0.0
    %438 = vadd.xlane.f32.xlu0 %v437
    %v439 = vpop.xlane.xlu0 %438
    %v440 = vsel %vm127, %v422, 0.0
    %441 = vadd.xlane.f32.xlu0 %v440
    %v442 = vpop.xlane.xlu0 %441
    %v443 = vsel %vm127, %v423, 0.0
    %444 = vadd.xlane.f32.xlu0 %v443
    %v445 = vpop.xlane.xlu0 %444
    %v446 = vsel %vm127, %v424, 0.0
    %447 = vadd.xlane.f32.xlu0 %v446
    %v448 = vpop.xlane.xlu0 %447
    %v449 = vpack.c.bf16 %v418, %v417
    %v450 = vpack.c.bf16 %v420, %v419
    %v451 = vpack.c.bf16 %v422, %v421
    %v452 = vpack.c.bf16 %v424, %v423
    %v454 = vsel %vm127, %v449, 0
    %v457 = vsel %vm127, %v450, 0
    %v460 = vsel %vm127, %v451, 0
    %v463 = vsel %vm127, %v452, 0
    %465 = vmatpush.bf16.msra.mxu0 0
    %466 = vmatpush.bf16.msra.mxu0 0
    %467 = vmatpush.bf16.msra.mxu0 0
    %468 = vmatpush.bf16.msra.mxu0 0
    %469 = vmatpush.bf16.msra.mxu0 %v315
    %470 = vmatpush.bf16.msra.mxu0 %v314
    %471 = vmatpush.bf16.msra.mxu0 %v313
    %472 = vmatpush.bf16.msra.mxu0 %v312
    %473 = vmatmul.bf16.gmra.mxu0 %v454
    %v474 = vpop.f32.mrf.mxu0
    %v475 = vadd.f32 0.0, %v474
    %v476 = vpop.f32.mrf.mxu0
    %v477 = vadd.f32 0.0, %v476
    %478 = vmatmul.bf16.gmra.mxu0 %v457
    %v479 = vpop.f32.mrf.mxu0
    %v480 = vadd.f32 0.0, %v479
    %v481 = vpop.f32.mrf.mxu0
    %v482 = vadd.f32 0.0, %v481
    %483 = vmatmul.bf16.gmra.mxu0 %v460
    %v484 = vpop.f32.mrf.mxu0
    %v485 = vadd.f32 0.0, %v484
    %v486 = vpop.f32.mrf.mxu0
    %v487 = vadd.f32 0.0, %v486
    %488 = vmatmul.bf16.gmra.mxu0 %v463
    %v489 = vpop.f32.mrf.mxu0
    %v490 = vadd.f32 0.0, %v489
    %v491 = vpop.f32.mrf.mxu0
    %v492 = vadd.f32 0.0, %v491
    %493 = vdwg.mxu0
    %v494 = vrcp.pop %v427
    %v495 = vrcp.pop %v430
    %v496 = vrcp.pop %v433
    %v497 = vrcp.pop %v436
    %v498 = vrcp.pop %v439
    %v499 = vrcp.pop %v442
    %v500 = vrcp.pop %v445
    %v501 = vrcp.pop %v448
    %v502 = vmul.f32 %v475, %v494
    %v503 = vmul.f32 %v477, %v495
    %v504 = vmul.f32 %v480, %v496
    %v505 = vmul.f32 %v482, %v497
    %v506 = vmul.f32 %v485, %v498
    %v507 = vmul.f32 %v487, %v499
    %v508 = vmul.f32 %v490, %v500
    %v509 = vmul.f32 %v492, %v501
    %s510 = scalar_lea.vmem %s0, 128
    %v511 = vld [vmem:[%s510] sm:$0xff]
    %v512 = vld [vmem:[%s510 + $0x8] sm:$0xff]
    %v513 = vld [vmem:[%s510 + $0x10] sm:$0xff]
    %v514 = vld [vmem:[%s510 + $0x18] sm:$0xff]
    %v515 = vld [vmem:[%s510 + $0x20] sm:$0xff]
    %v516 = vld [vmem:[%s510 + $0x28] sm:$0xff]
    %v517 = vld [vmem:[%s510 + $0x30] sm:$0xff]
    %v518 = vld [vmem:[%s510 + $0x38] sm:$0xff]
    %v519 = vmul.f32 %v511, 0.25503486
    %v520 = vmul.f32 %v512, 0.25503486
    %v521 = vmul.f32 %v513, 0.25503486
    %v522 = vmul.f32 %v514, 0.25503486
    %v523 = vmul.f32 %v515, 0.25503486
    %v524 = vmul.f32 %v516, 0.25503486
    %v525 = vmul.f32 %v517, 0.25503486
    %v526 = vmul.f32 %v518, 0.25503486
    %v527 = vpack.c.bf16 %v520, %v519
    %v528 = vpack.c.bf16 %v522, %v521
    %v529 = vpack.c.bf16 %v524, %v523
    %v530 = vpack.c.bf16 %v526, %v525
    %s531 = scalar_lea.vmem %s1, 128
    %v532 = vld [vmem:[%s531] sm:$0xff]
    %v533 = vld [vmem:[%s531 + $0x8] sm:$0xff]
    %v534 = vld [vmem:[%s531 + $0x10] sm:$0xff]
    %v535 = vld [vmem:[%s531 + $0x18] sm:$0xff]
    %v536 = vld [vmem:[%s531 + $0x20] sm:$0xff]
    %v537 = vld [vmem:[%s531 + $0x28] sm:$0xff]
    %v538 = vld [vmem:[%s531 + $0x30] sm:$0xff]
    %v539 = vld [vmem:[%s531 + $0x38] sm:$0xff]
    %v540 = vpack.c.bf16 %v533, %v532
    %v541 = vpack.c.bf16 %v535, %v534
    %v542 = vpack.c.bf16 %v537, %v536
    %v543 = vpack.c.bf16 %v539, %v538
    %s544 = scalar_lea.vmem %s3, 128
    %v545 = vld [vmem:[%s544] sm:$0xff]
    %v546 = vld [vmem:[%s544 + $0x8] sm:$0xff]
    %v547 = vld [vmem:[%s544 + $0x10] sm:$0xff]
    %v548 = vld [vmem:[%s544 + $0x18] sm:$0xff]
    %v549 = vld [vmem:[%s544 + $0x20] sm:$0xff]
    %v550 = vld [vmem:[%s544 + $0x28] sm:$0xff]
    %v551 = vld [vmem:[%s544 + $0x30] sm:$0xff]
    %v552 = vld [vmem:[%s544 + $0x38] sm:$0xff]
    %v553 = vpack.c.bf16 %v546, %v545
    %v554 = vpack.c.bf16 %v548, %v547
    %v555 = vpack.c.bf16 %v550, %v549
    %v556 = vpack.c.bf16 %v552, %v551
    %v558 = vsel %vm73, %v527, 0
    %v561 = vsel %vm73, %v528, 0
    %v564 = vsel %vm73, %v529, 0
    %v567 = vsel %vm73, %v530, 0
    %v570 = vsel %vm73, %v540, 0
    %v573 = vsel %vm73, %v541, 0
    %v576 = vsel %vm73, %v542, 0
    %v579 = vsel %vm73, %v543, 0
    %581 = vmatpush.bf16.xpose.msra.mxu0 0
    %582 = vmatpush.bf16.xpose.msra.mxu0 0
    %583 = vmatpush.bf16.xpose.msra.mxu0 0
    %584 = vmatpush.bf16.xpose.msra.mxu0 0
    %585 = vmatpush.bf16.xpose.msra.mxu0 %v579
    %586 = vmatpush.bf16.xpose.msra.mxu0 %v576
    %587 = vmatpush.bf16.xpose.msra.mxu0 %v573
    %588 = vmatpush.bf16.xpose.msra.mxu0 %v570
    %589 = vmatmul.bf16.gmra.mxu0 %v558
    %v590 = vpop.f32.mrf.mxu0
    %v591 = vadd.f32 %v21, %v590
    %v592 = vpop.f32.mrf.mxu0
    %v593 = vadd.f32 %v22, %v592
    %594 = vmatmul.bf16.gmra.mxu0 %v561
    %v595 = vpop.f32.mrf.mxu0
    %v596 = vadd.f32 %v23, %v595
    %v597 = vpop.f32.mrf.mxu0
    %v598 = vadd.f32 %v24, %v597
    %599 = vmatmul.bf16.gmra.mxu0 %v564
    %v600 = vpop.f32.mrf.mxu0
    %v601 = vadd.f32 %v25, %v600
    %v602 = vpop.f32.mrf.mxu0
    %v603 = vadd.f32 %v26, %v602
    %604 = vmatmul.bf16.gmra.mxu0 %v567
    %v605 = vpop.f32.mrf.mxu0
    %v606 = vadd.f32 %v27, %v605
    %v607 = vpop.f32.mrf.mxu0
    %v608 = vadd.f32 %v28, %v607
    %609 = vdwg.mxu0
    %v610 = vsel %vm127, %v591, -inf
    %611 = vmax.xlane.f32.xlu0 %v610
    %v612 = vpop.xlane.xlu0 %611
    %v613 = vsel %vm127, %v593, -inf
    %614 = vmax.xlane.f32.xlu0 %v613
    %v615 = vpop.xlane.xlu0 %614
    %v616 = vsel %vm127, %v596, -inf
    %617 = vmax.xlane.f32.xlu0 %v616
    %v618 = vpop.xlane.xlu0 %617
    %v619 = vsel %vm127, %v598, -inf
    %620 = vmax.xlane.f32.xlu0 %v619
    %v621 = vpop.xlane.xlu0 %620
    %v622 = vsel %vm127, %v601, -inf
    %623 = vmax.xlane.f32.xlu0 %v622
    %v624 = vpop.xlane.xlu0 %623
    %v625 = vsel %vm127, %v603, -inf
    %626 = vmax.xlane.f32.xlu0 %v625
    %v627 = vpop.xlane.xlu0 %626
    %v628 = vsel %vm127, %v606, -inf
    %629 = vmax.xlane.f32.xlu0 %v628
    %v630 = vpop.xlane.xlu0 %629
    %v631 = vsel %vm127, %v608, -inf
    %632 = vmax.xlane.f32.xlu0 %v631
    %v633 = vpop.xlane.xlu0 %632
    %vm634 = vcmp.eq.f32.partialorder %v612, -inf
    %vm635 = vcmp.eq.f32.partialorder %v615, -inf
    %vm636 = vcmp.eq.f32.partialorder %v618, -inf
    %vm637 = vcmp.eq.f32.partialorder %v621, -inf
    %vm638 = vcmp.eq.f32.partialorder %v624, -inf
    %vm639 = vcmp.eq.f32.partialorder %v627, -inf
    %vm640 = vcmp.eq.f32.partialorder %v630, -inf
    %vm641 = vcmp.eq.f32.partialorder %v633, -inf
    %v642 = vsel %vm634, 0.0, %v612
    %v643 = vsel %vm635, 0.0, %v615
    %v644 = vsel %vm636, 0.0, %v618
    %v645 = vsel %vm637, 0.0, %v621
    %v646 = vsel %vm638, 0.0, %v624
    %v647 = vsel %vm639, 0.0, %v627
    %v648 = vsel %vm640, 0.0, %v630
    %v649 = vsel %vm641, 0.0, %v633
    %v650 = vsub.f32 %v591, %v642
    %v651 = vsub.f32 %v593, %v643
    %v652 = vsub.f32 %v596, %v644
    %v653 = vsub.f32 %v598, %v645
    %v654 = vsub.f32 %v601, %v646
    %v655 = vsub.f32 %v603, %v647
    %v656 = vsub.f32 %v606, %v648
    %v657 = vsub.f32 %v608, %v649
    %v658 = vpow.pop %v650
    %v659 = vpow.pop %v651
    %v660 = vpow.pop %v652
    %v661 = vpow.pop %v653
    %v662 = vpow.pop %v654
    %v663 = vpow.pop %v655
    %v664 = vpow.pop %v656
    %v665 = vpow.pop %v657
    %v666 = vsel %vm127, %v658, 0.0
    %667 = vadd.xlane.f32.xlu0 %v666
    %v668 = vpop.xlane.xlu0 %667
    %v669 = vsel %vm127, %v659, 0.0
    %670 = vadd.xlane.f32.xlu0 %v669
    %v671 = vpop.xlane.xlu0 %670
    %v672 = vsel %vm127, %v660, 0.0
    %673 = vadd.xlane.f32.xlu0 %v672
    %v674 = vpop.xlane.xlu0 %673
    %v675 = vsel %vm127, %v661, 0.0
    %676 = vadd.xlane.f32.xlu0 %v675
    %v677 = vpop.xlane.xlu0 %676
    %v678 = vsel %vm127, %v662, 0.0
    %679 = vadd.xlane.f32.xlu0 %v678
    %v680 = vpop.xlane.xlu0 %679
    %v681 = vsel %vm127, %v663, 0.0
    %682 = vadd.xlane.f32.xlu0 %v681
    %v683 = vpop.xlane.xlu0 %682
    %v684 = vsel %vm127, %v664, 0.0
    %685 = vadd.xlane.f32.xlu0 %v684
    %v686 = vpop.xlane.xlu0 %685
    %v687 = vsel %vm127, %v665, 0.0
    %688 = vadd.xlane.f32.xlu0 %v687
    %v689 = vpop.xlane.xlu0 %688
    %v690 = vpack.c.bf16 %v659, %v658
    %v691 = vpack.c.bf16 %v661, %v660
    %v692 = vpack.c.bf16 %v663, %v662
    %v693 = vpack.c.bf16 %v665, %v664
    %v695 = vsel %vm127, %v690, 0
    %v698 = vsel %vm127, %v691, 0
    %v701 = vsel %vm127, %v692, 0
    %v704 = vsel %vm127, %v693, 0
    %706 = vmatpush.bf16.msra.mxu0 0
    %707 = vmatpush.bf16.msra.mxu0 0
    %708 = vmatpush.bf16.msra.mxu0 0
    %709 = vmatpush.bf16.msra.mxu0 0
    %710 = vmatpush.bf16.msra.mxu0 %v556
    %711 = vmatpush.bf16.msra.mxu0 %v555
    %712 = vmatpush.bf16.msra.mxu0 %v554
    %713 = vmatpush.bf16.msra.mxu0 %v553
    %714 = vmatmul.bf16.gmra.mxu0 %v695
    %v715 = vpop.f32.mrf.mxu0
    %v716 = vadd.f32 0.0, %v715
    %v717 = vpop.f32.mrf.mxu0
    %v718 = vadd.f32 0.0, %v717
    %719 = vmatmul.bf16.gmra.mxu0 %v698
    %v720 = vpop.f32.mrf.mxu0
    %v721 = vadd.f32 0.0, %v720
    %v722 = vpop.f32.mrf.mxu0
    %v723 = vadd.f32 0.0, %v722
    %724 = vmatmul.bf16.gmra.mxu0 %v701
    %v725 = vpop.f32.mrf.mxu0
    %v726 = vadd.f32 0.0, %v725
    %v727 = vpop.f32.mrf.mxu0
    %v728 = vadd.f32 0.0, %v727
    %729 = vmatmul.bf16.gmra.mxu0 %v704
    %v730 = vpop.f32.mrf.mxu0
    %v731 = vadd.f32 0.0, %v730
    %v732 = vpop.f32.mrf.mxu0
    %v733 = vadd.f32 0.0, %v732
    %734 = vdwg.mxu0
    %v735 = vrcp.pop %v668
    %v736 = vrcp.pop %v671
    %v737 = vrcp.pop %v674
    %v738 = vrcp.pop %v677
    %v739 = vrcp.pop %v680
    %v740 = vrcp.pop %v683
    %v741 = vrcp.pop %v686
    %v742 = vrcp.pop %v689
    %v743 = vmul.f32 %v716, %v735
    %v744 = vmul.f32 %v718, %v736
    %v745 = vmul.f32 %v721, %v737
    %v746 = vmul.f32 %v723, %v738
    %v747 = vmul.f32 %v726, %v739
    %v748 = vmul.f32 %v728, %v740
    %v749 = vmul.f32 %v731, %v741
    %v750 = vmul.f32 %v733, %v742
    %s751 = scalar_lea.vmem %s0, 192
    %v752 = vld [vmem:[%s751] sm:$0xff]
    %v753 = vld [vmem:[%s751 + $0x8] sm:$0xff]
    %v754 = vld [vmem:[%s751 + $0x10] sm:$0xff]
    %v755 = vld [vmem:[%s751 + $0x18] sm:$0xff]
    %v756 = vld [vmem:[%s751 + $0x20] sm:$0xff]
    %v757 = vld [vmem:[%s751 + $0x28] sm:$0xff]
    %v758 = vld [vmem:[%s751 + $0x30] sm:$0xff]
    %v759 = vld [vmem:[%s751 + $0x38] sm:$0xff]
    %v760 = vmul.f32 %v752, 0.25503486
    %v761 = vmul.f32 %v753, 0.25503486
    %v762 = vmul.f32 %v754, 0.25503486
    %v763 = vmul.f32 %v755, 0.25503486
    %v764 = vmul.f32 %v756, 0.25503486
    %v765 = vmul.f32 %v757, 0.25503486
    %v766 = vmul.f32 %v758, 0.25503486
    %v767 = vmul.f32 %v759, 0.25503486
    %v768 = vpack.c.bf16 %v761, %v760
    %v769 = vpack.c.bf16 %v763, %v762
    %v770 = vpack.c.bf16 %v765, %v764
    %v771 = vpack.c.bf16 %v767, %v766
    %s772 = scalar_lea.vmem %s1, 192
    %v773 = vld [vmem:[%s772] sm:$0xff]
    %v774 = vld [vmem:[%s772 + $0x8] sm:$0xff]
    %v775 = vld [vmem:[%s772 + $0x10] sm:$0xff]
    %v776 = vld [vmem:[%s772 + $0x18] sm:$0xff]
    %v777 = vld [vmem:[%s772 + $0x20] sm:$0xff]
    %v778 = vld [vmem:[%s772 + $0x28] sm:$0xff]
    %v779 = vld [vmem:[%s772 + $0x30] sm:$0xff]
    %v780 = vld [vmem:[%s772 + $0x38] sm:$0xff]
    %v781 = vpack.c.bf16 %v774, %v773
    %v782 = vpack.c.bf16 %v776, %v775
    %v783 = vpack.c.bf16 %v778, %v777
    %v784 = vpack.c.bf16 %v780, %v779
    %s785 = scalar_lea.vmem %s3, 192
    %v786 = vld [vmem:[%s785] sm:$0xff]
    %v787 = vld [vmem:[%s785 + $0x8] sm:$0xff]
    %v788 = vld [vmem:[%s785 + $0x10] sm:$0xff]
    %v789 = vld [vmem:[%s785 + $0x18] sm:$0xff]
    %v790 = vld [vmem:[%s785 + $0x20] sm:$0xff]
    %v791 = vld [vmem:[%s785 + $0x28] sm:$0xff]
    %v792 = vld [vmem:[%s785 + $0x30] sm:$0xff]
    %v793 = vld [vmem:[%s785 + $0x38] sm:$0xff]
    %v794 = vpack.c.bf16 %v787, %v786
    %v795 = vpack.c.bf16 %v789, %v788
    %v796 = vpack.c.bf16 %v791, %v790
    %v797 = vpack.c.bf16 %v793, %v792
    %v799 = vsel %vm73, %v768, 0
    %v802 = vsel %vm73, %v769, 0
    %v805 = vsel %vm73, %v770, 0
    %v808 = vsel %vm73, %v771, 0
    %v811 = vsel %vm73, %v781, 0
    %v814 = vsel %vm73, %v782, 0
    %v817 = vsel %vm73, %v783, 0
    %v820 = vsel %vm73, %v784, 0
    %822 = vmatpush.bf16.xpose.msra.mxu0 0
    %823 = vmatpush.bf16.xpose.msra.mxu0 0
    %824 = vmatpush.bf16.xpose.msra.mxu0 0
    %825 = vmatpush.bf16.xpose.msra.mxu0 0
    %826 = vmatpush.bf16.xpose.msra.mxu0 %v820
    %827 = vmatpush.bf16.xpose.msra.mxu0 %v817
    %828 = vmatpush.bf16.xpose.msra.mxu0 %v814
    %829 = vmatpush.bf16.xpose.msra.mxu0 %v811
    %830 = vmatmul.bf16.gmra.mxu0 %v799
    %v831 = vpop.f32.mrf.mxu0
    %v832 = vadd.f32 %v21, %v831
    %v833 = vpop.f32.mrf.mxu0
    %v834 = vadd.f32 %v22, %v833
    %835 = vmatmul.bf16.gmra.mxu0 %v802
    %v836 = vpop.f32.mrf.mxu0
    %v837 = vadd.f32 %v23, %v836
    %v838 = vpop.f32.mrf.mxu0
    %v839 = vadd.f32 %v24, %v838
    %840 = vmatmul.bf16.gmra.mxu0 %v805
    %v841 = vpop.f32.mrf.mxu0
    %v842 = vadd.f32 %v25, %v841
    %v843 = vpop.f32.mrf.mxu0
    %v844 = vadd.f32 %v26, %v843
    %845 = vmatmul.bf16.gmra.mxu0 %v808
    %v846 = vpop.f32.mrf.mxu0
    %v847 = vadd.f32 %v27, %v846
    %v848 = vpop.f32.mrf.mxu0
    %v849 = vadd.f32 %v28, %v848
    %850 = vdwg.mxu0
    %v851 = vsel %vm127, %v832, -inf
    %852 = vmax.xlane.f32.xlu0 %v851
    %v853 = vpop.xlane.xlu0 %852
    %v854 = vsel %vm127, %v834, -inf
    %855 = vmax.xlane.f32.xlu0 %v854
    %v856 = vpop.xlane.xlu0 %855
    %v857 = vsel %vm127, %v837, -inf
    %858 = vmax.xlane.f32.xlu0 %v857
    %v859 = vpop.xlane.xlu0 %858
    %v860 = vsel %vm127, %v839, -inf
    %861 = vmax.xlane.f32.xlu0 %v860
    %v862 = vpop.xlane.xlu0 %861
    %v863 = vsel %vm127, %v842, -inf
    %864 = vmax.xlane.f32.xlu0 %v863
    %v865 = vpop.xlane.xlu0 %864
    %v866 = vsel %vm127, %v844, -inf
    %867 = vmax.xlane.f32.xlu0 %v866
    %v868 = vpop.xlane.xlu0 %867
    %v869 = vsel %vm127, %v847, -inf
    %870 = vmax.xlane.f32.xlu0 %v869
    %v871 = vpop.xlane.xlu0 %870
    %v872 = vsel %vm127, %v849, -inf
    %873 = vmax.xlane.f32.xlu0 %v872
    %v874 = vpop.xlane.xlu0 %873
    %vm875 = vcmp.eq.f32.partialorder %v853, -inf
    %vm876 = vcmp.eq.f32.partialorder %v856, -inf
    %vm877 = vcmp.eq.f32.partialorder %v859, -inf
    %vm878 = vcmp.eq.f32.partialorder %v862, -inf
    %vm879 = vcmp.eq.f32.partialorder %v865, -inf
    %vm880 = vcmp.eq.f32.partialorder %v868, -inf
    %vm881 = vcmp.eq.f32.partialorder %v871, -inf
    %vm882 = vcmp.eq.f32.partialorder %v874, -inf
    %v883 = vsel %vm875, 0.0, %v853
    %v884 = vsel %vm876, 0.0, %v856
    %v885 = vsel %vm877, 0.0, %v859
    %v886 = vsel %vm878, 0.0, %v862
    %v887 = vsel %vm879, 0.0, %v865
    %v888 = vsel %vm880, 0.0, %v868
    %v889 = vsel %vm881, 0.0, %v871
    %v890 = vsel %vm882, 0.0, %v874
    %v891 = vsub.f32 %v832, %v883
    %v892 = vsub.f32 %v834, %v884
    %v893 = vsub.f32 %v837, %v885
    %v894 = vsub.f32 %v839, %v886
    %v895 = vsub.f32 %v842, %v887
    %v896 = vsub.f32 %v844, %v888
    %v897 = vsub.f32 %v847, %v889
    %v898 = vsub.f32 %v849, %v890
    %v899 = vpow.pop %v891
    %v900 = vpow.pop %v892
    %v901 = vpow.pop %v893
    %v902 = vpow.pop %v894
    %v903 = vpow.pop %v895
    %v904 = vpow.pop %v896
    %v905 = vpow.pop %v897
    %v906 = vpow.pop %v898
    %v907 = vsel %vm127, %v899, 0.0
    %908 = vadd.xlane.f32.xlu0 %v907
    %v909 = vpop.xlane.xlu0 %908
    %v910 = vsel %vm127, %v900, 0.0
    %911 = vadd.xlane.f32.xlu0 %v910
    %v912 = vpop.xlane.xlu0 %911
    %v913 = vsel %vm127, %v901, 0.0
    %914 = vadd.xlane.f32.xlu0 %v913
    %v915 = vpop.xlane.xlu0 %914
    %v916 = vsel %vm127, %v902, 0.0
    %917 = vadd.xlane.f32.xlu0 %v916
    %v918 = vpop.xlane.xlu0 %917
    %v919 = vsel %vm127, %v903, 0.0
    %920 = vadd.xlane.f32.xlu0 %v919
    %v921 = vpop.xlane.xlu0 %920
    %v922 = vsel %vm127, %v904, 0.0
    %923 = vadd.xlane.f32.xlu0 %v922
    %v924 = vpop.xlane.xlu0 %923
    %v925 = vsel %vm127, %v905, 0.0
    %926 = vadd.xlane.f32.xlu0 %v925
    %v927 = vpop.xlane.xlu0 %926
    %v928 = vsel %vm127, %v906, 0.0
    %929 = vadd.xlane.f32.xlu0 %v928
    %v930 = vpop.xlane.xlu0 %929
    %v931 = vpack.c.bf16 %v900, %v899
    %v932 = vpack.c.bf16 %v902, %v901
    %v933 = vpack.c.bf16 %v904, %v903
    %v934 = vpack.c.bf16 %v906, %v905
    %v936 = vsel %vm127, %v931, 0
    %v939 = vsel %vm127, %v932, 0
    %v942 = vsel %vm127, %v933, 0
    %v945 = vsel %vm127, %v934, 0
    %947 = vmatpush.bf16.msra.mxu0 0
    %948 = vmatpush.bf16.msra.mxu0 0
    %949 = vmatpush.bf16.msra.mxu0 0
    %950 = vmatpush.bf16.msra.mxu0 0
    %951 = vmatpush.bf16.msra.mxu0 %v797
    %952 = vmatpush.bf16.msra.mxu0 %v796
    %953 = vmatpush.bf16.msra.mxu0 %v795
    %954 = vmatpush.bf16.msra.mxu0 %v794
    %955 = vmatmul.bf16.gmra.mxu0 %v936
    %v956 = vpop.f32.mrf.mxu0
    %v957 = vadd.f32 0.0, %v956
    %v958 = vpop.f32.mrf.mxu0
    %v959 = vadd.f32 0.0, %v958
    %960 = vmatmul.bf16.gmra.mxu0 %v939
    %v961 = vpop.f32.mrf.mxu0
    %v962 = vadd.f32 0.0, %v961
    %v963 = vpop.f32.mrf.mxu0
    %v964 = vadd.f32 0.0, %v963
    %965 = vmatmul.bf16.gmra.mxu0 %v942
    %v966 = vpop.f32.mrf.mxu0
    %v967 = vadd.f32 0.0, %v966
    %v968 = vpop.f32.mrf.mxu0
    %v969 = vadd.f32 0.0, %v968
    %970 = vmatmul.bf16.gmra.mxu0 %v945
    %v971 = vpop.f32.mrf.mxu0
    %v972 = vadd.f32 0.0, %v971
    %v973 = vpop.f32.mrf.mxu0
    %v974 = vadd.f32 0.0, %v973
    %975 = vdwg.mxu0
    %v976 = vrcp.pop %v909
    %v977 = vrcp.pop %v912
    %v978 = vrcp.pop %v915
    %v979 = vrcp.pop %v918
    %v980 = vrcp.pop %v921
    %v981 = vrcp.pop %v924
    %v982 = vrcp.pop %v927
    %v983 = vrcp.pop %v930
    %v984 = vmul.f32 %v957, %v976
    %v985 = vmul.f32 %v959, %v977
    %v986 = vmul.f32 %v962, %v978
    %v987 = vmul.f32 %v964, %v979
    %v988 = vmul.f32 %v967, %v980
    %v989 = vmul.f32 %v969, %v981
    %v990 = vmul.f32 %v972, %v982
    %v991 = vmul.f32 %v974, %v983
    %1000 = vrot.lane.b32.xlu0 %v502, 32
    %v1001 = vpop.permute.xlu0 %1000
    %1002 = vrot.lane.b32.xlu0 %v503, 32
    %v1003 = vpop.permute.xlu0 %1002
    %1004 = vrot.lane.b32.xlu0 %v504, 32
    %v1005 = vpop.permute.xlu0 %1004
    %1006 = vrot.lane.b32.xlu0 %v505, 32
    %v1007 = vpop.permute.xlu0 %1006
    %1008 = vrot.lane.b32.xlu0 %v506, 32
    %v1009 = vpop.permute.xlu0 %1008
    %1010 = vrot.lane.b32.xlu0 %v507, 32
    %v1011 = vpop.permute.xlu0 %1010
    %1012 = vrot.lane.b32.xlu0 %v508, 32
    %v1013 = vpop.permute.xlu0 %1012
    %1014 = vrot.lane.b32.xlu0 %v509, 32
    %v1015 = vpop.permute.xlu0 %1014
    %1032 = vrot.lane.b32.xlu0 %v743, 64
    %v1033 = vpop.permute.xlu0 %1032
    %1034 = vrot.lane.b32.xlu0 %v744, 64
    %v1035 = vpop.permute.xlu0 %1034
    %1036 = vrot.lane.b32.xlu0 %v745, 64
    %v1037 = vpop.permute.xlu0 %1036
    %1038 = vrot.lane.b32.xlu0 %v746, 64
    %v1039 = vpop.permute.xlu0 %1038
    %1040 = vrot.lane.b32.xlu0 %v747, 64
    %v1041 = vpop.permute.xlu0 %1040
    %1042 = vrot.lane.b32.xlu0 %v748, 64
    %v1043 = vpop.permute.xlu0 %1042
    %1044 = vrot.lane.b32.xlu0 %v749, 64
    %v1045 = vpop.permute.xlu0 %1044
    %1046 = vrot.lane.b32.xlu0 %v750, 64
    %v1047 = vpop.permute.xlu0 %1046
    %1064 = vrot.lane.b32.xlu0 %v984, 96
    %v1065 = vpop.permute.xlu0 %1064
    %1066 = vrot.lane.b32.xlu0 %v985, 96
    %v1067 = vpop.permute.xlu0 %1066
    %1068 = vrot.lane.b32.xlu0 %v986, 96
    %v1069 = vpop.permute.xlu0 %1068
    %1070 = vrot.lane.b32.xlu0 %v987, 96
    %v1071 = vpop.permute.xlu0 %1070
    %1072 = vrot.lane.b32.xlu0 %v988, 96
    %v1073 = vpop.permute.xlu0 %1072
    %1074 = vrot.lane.b32.xlu0 %v989, 96
    %v1075 = vpop.permute.xlu0 %1074
    %1076 = vrot.lane.b32.xlu0 %v990, 96
    %v1077 = vpop.permute.xlu0 %1076
    %1078 = vrot.lane.b32.xlu0 %v991, 96
    %v1079 = vpop.permute.xlu0 %1078
    %v1088 = vsel %vm73, %v261, %v1001
    %v1089 = vsel %vm73, %v262, %v1003
    %v1090 = vsel %vm73, %v263, %v1005
    %v1091 = vsel %vm73, %v264, %v1007
    %v1092 = vsel %vm73, %v265, %v1009
    %v1093 = vsel %vm73, %v266, %v1011
    %v1094 = vsel %vm73, %v267, %v1013
    %v1095 = vsel %vm73, %v268, %v1015
    %v1096 = vsel %vm127, %v1088, %v1033
    %v1097 = vsel %vm127, %v1089, %v1035
    %v1098 = vsel %vm127, %v1090, %v1037
    %v1099 = vsel %vm127, %v1091, %v1039
    %v1100 = vsel %vm127, %v1092, %v1041
    %v1101 = vsel %vm127, %v1093, %v1043
    %v1102 = vsel %vm127, %v1094, %v1045
    %v1103 = vsel %vm127, %v1095, %v1047
    %vm1104 = vcmask 785408
    %v1105 = vsel %vm1104, %v1096, %v1065
    %v1106 = vsel %vm1104, %v1097, %v1067
    %v1107 = vsel %vm1104, %v1098, %v1069
    %v1108 = vsel %vm1104, %v1099, %v1071
    %v1109 = vsel %vm1104, %v1100, %v1073
    %v1110 = vsel %vm1104, %v1101, %v1075
    %v1111 = vsel %vm1104, %v1102, %v1077
    %v1112 = vsel %vm1104, %v1103, %v1079
    %1113 = vst [vmem:[#allocation2] sm:$0xff] %v1105
    %1114 = vst [vmem:[#allocation2 + $0x8] sm:$0xff] %v1106
    %1115 = vst [vmem:[#allocation2 + $0x10] sm:$0xff] %v1107
    %1116 = vst [vmem:[#allocation2 + $0x18] sm:$0xff] %v1108
    %1117 = vst [vmem:[#allocation2 + $0x20] sm:$0xff] %v1109
    %1118 = vst [vmem:[#allocation2 + $0x28] sm:$0xff] %v1110
    %1119 = vst [vmem:[#allocation2 + $0x30] sm:$0xff] %v1111
    %1120 = vst [vmem:[#allocation2 + $0x38] sm:$0xff] %v1112
    // Predicated region
    $region18: #{tpu_custom_call.1} parent=1 // pred_check
      _
    $region19: #{tpu_custom_call.1} parent=1 // pred_check_branch
      %1122 = sbr.rel (0) target = $region21
    $region20: #{tpu_custom_call.1} parent=1 // pred_region
      %1124 = vsyncadd [#allocation3], 0
      %s1125 = sshll.u32 [#allocation2], 4
      %s1126 = int_to_ptr.vmem [resolvable:$true] %s1125
      %s1127 = sshll.u32 %s4, 4
      %s1128 = int_to_ptr.hbm [resolvable:$true] %s1127
      %1133 = dma.vmem_to_hbm [thread:$0]  %s1126, 1024, %s1128, [#allocation3], 128, 128, 8
    $region21: #{tpu_custom_call.1} parent=1 // pred_fallthru
      _
    // Predicated region
    $region22: #{tpu_custom_call.1} parent=1 // pred_check
      _
    $region23: #{tpu_custom_call.1} parent=1 // pred_check_branch
      %1135 = sbr.rel (0) target = $region25
    $region24: #{tpu_custom_call.1} parent=1 // pred_region
      %1137 = dma.done [#allocation3], 1024
    $region25: #{tpu_custom_call.1} parent=1 // pred_fallthru
      _
    %1138 = vsyncpa [#allocation3], 1

</llo_original>
